<compile_context>
chip_gen: v7x
topology: tpu7x:2x2x1
jax: 0.10.0
libtpu: 0.0.40
codegen_flags: <defaults>
</compile_context>

<pallas_src>
import math
import jax
import jax.numpy as jnp
from jax.experimental import pallas as pl
from jax.experimental.pallas import tpu as pltpu

HIDDEN = 32          # hidden_size
A_LIST = 7           # a_list_size
K_TOTAL = HIDDEN * HIDDEN * A_LIST   # 7168


def _episodic_attn_kernel(w1_ref, z_ref, w2t_ref, out_ref):
    """One gate evaluation per grid step.

    w1_ref : (H, K)      weight tile, VMEM-resident across the whole grid
    z_ref  : (1, 1, K)   this step's packed concat_list
    w2t_ref: (H, 1)      W_c2 transposed
    out_ref: (1, 1, 128) lane-dense output row (G splat across lanes)
    """
    w1 = w1_ref[...].astype(jnp.float32)            # (H, K), f32 accumulate even for bf16 weights
    z = z_ref[0].astype(jnp.float32)                 # (1, K)

    # l_1 = tanh(W_c1 @ z): sublane-broadcast multiply (VPU) + one deferred
    # cross-lane reduction over the full (H, K) product (Mosaic lowers this as
    # lane-chunk vadds followed by a single XLU reduce).
    acc = jnp.sum(w1 * z, axis=-1, keepdims=True)    # (H, 1)
    l1 = jnp.tanh(acc)                               # (H, 1)

    # G = W_c2 @ l_1: elementwise multiply + sublane reduce (no MXU).
    g = jnp.sum(w2t_ref[...] * l1, axis=0, keepdims=True)   # (1, 1)

    # Lane-dense store: splat G across 128 lanes -> unmasked writeback.
    out_ref[...] = jnp.broadcast_to(g.reshape(1, 1, 1), (1, 1, 128))


def episodic_attn_batched(w_c1, w_c2, z, *, weight_dtype=None):
    """Batched gate evaluation.

    w_c1: (H, K) float32 weights, w_c2: (1, H), z: (B, K) packed concat rows.
    Returns (B,) gate values G.
    """
    H, K = w_c1.shape
    B = z.shape[0]
    assert z.shape == (B, K)

    if weight_dtype is not None:
        w_c1 = w_c1.astype(weight_dtype)             # e.g. bf16: halves the dominant HBM read
    w2t = jnp.reshape(w_c2, (H, 1)).astype(jnp.float32)   # (1,H) -> (H,1): contiguous reshape
    z3 = jnp.reshape(z, (B, 1, K)).astype(jnp.float32)    # leading batch axis for (1,1,K) blocks

    out = pl.pallas_call(
        _episodic_attn_kernel,
        out_shape=jax.ShapeDtypeStruct((B, 1, 128), jnp.float32),
        grid_spec=pltpu.PrefetchScalarGridSpec(
            num_scalar_prefetch=0,
            grid=(B,),
            in_specs=[
                # Constant index_map: weight block DMA'd once, VMEM-resident for all B steps.
                pl.BlockSpec((H, K), lambda b: (0, 0)),
                # Per-step packed z row (single consolidated input instead of 7 chunks).
                pl.BlockSpec((1, 1, K), lambda b: (b, 0, 0)),
                # Tiny W_c2^T, also resident.
                pl.BlockSpec((H, 1), lambda b: (0, 0)),
            ],
            out_specs=pl.BlockSpec((1, 1, 128), lambda b: (b, 0, 0)),
        ),
        compiler_params=pltpu.CompilerParams(
            # Batch axis parallel: v7x's two TensorCores split the grid;
            # no-op on single-TC v5e/v6e.
            dimension_semantics=("parallel",)),
    )(w_c1, z3, w2t)
    return out[:, 0, 0]                               # (B,)


def pack_concat_list(concat_list):
    """torch.cat(concat_list, dim=0).view(-1) — row-major flatten + concat."""
    return jnp.concatenate([jnp.reshape(c, (-1,)) for c in concat_list], axis=0)


def episodic_attn(w_c1, w_c2, concat_list, *, weight_dtype=None):
    """Single-evaluation wrapper matching EpisodicAttn.forward (returns (1, 1))."""
    z = pack_concat_list(concat_list)[None, :]        # (1, K), packed once per call
    g = episodic_attn_batched(w_c1, w_c2, z, weight_dtype=weight_dtype)
    return g.reshape(1, 1)


def init_params(key, hidden=HIDDEN, a_list=A_LIST):
    """Deterministic init mirroring reset_parameters():
    2-D params end up xavier_normal_, 1-D params uniform(-stdv, stdv)."""
    k1, k2, k3, k4 = jax.random.split(key, 4)
    fan_in1, fan_out1 = hidden * hidden * a_list, hidden
    std1 = math.sqrt(2.0 / (fan_in1 + fan_out1))
    w_c1 = std1 * jax.random.normal(k1, (hidden, hidden * hidden * a_list), jnp.float32)
    std2 = math.sqrt(2.0 / (hidden + 1))
    w_c2 = std2 * jax.random.normal(k2, (1, hidden), jnp.float32)
    stdv = 1.0 / math.sqrt(hidden)
    b_c1 = jax.random.uniform(k3, (hidden,), jnp.float32, -stdv, stdv)  # unused in forward
    b_c2 = jax.random.uniform(k4, (1,), jnp.float32, -stdv, stdv)       # unused in forward
    return w_c1, w_c2, b_c1, b_c2


def reference_batched(w_c1, w_c2, z):
    """Pure-JAX reference: G[b] = W_c2 @ tanh(W_c1 @ z[b])."""
    l1 = jnp.tanh(z @ w_c1.T)          # (B, H)
    return (l1 @ w_c2.T)[:, 0]         # (B,)


if __name__ == "__main__":
    key = jax.random.PRNGKey(0)
    pkey, dkey = jax.random.split(key)
    w_c1, w_c2, b_c1, b_c2 = init_params(pkey)

    # Batch of B independent concat_lists, each a_list_size tensors of (H, H).
    B = 4
    data = jax.random.normal(dkey, (B, A_LIST, HIDDEN, HIDDEN), jnp.float32)
    z = jnp.reshape(data, (B, K_TOTAL))   # == cat(dim=0).view(-1) per batch element

    # f32 batched path.
    g = episodic_attn_batched(w_c1, w_c2, z)
    jax.block_until_ready(g)
    g_ref = reference_batched(w_c1, w_c2, z)
    assert g.shape == (B,)
    assert jnp.allclose(g, g_ref, rtol=1e-5, atol=1e-5), (g, g_ref)

    # bf16-weight path (halves the dominant W_c1 HBM read; f32 accumulation).
    g_bf16 = episodic_attn_batched(w_c1, w_c2, z, weight_dtype=jnp.bfloat16)
    jax.block_until_ready(g_bf16)
    g_ref_bf16 = reference_batched(
        w_c1.astype(jnp.bfloat16).astype(jnp.float32), w_c2, z)
    assert jnp.allclose(g_bf16, g_ref_bf16, rtol=1e-4, atol=1e-4), (g_bf16, g_ref_bf16)

    # Module-shaped single evaluation (matches EpisodicAttn.forward exactly).
    concat_list = [data[0, a] for a in range(A_LIST)]
    g1 = episodic_attn(w_c1, w_c2, concat_list)
    jax.block_until_ready(g1)
    assert g1.shape == (1, 1)
    assert jnp.allclose(g1[0, 0], g_ref[0], rtol=1e-5, atol=1e-5), (g1, g_ref[0])

    # TODO(synk): dropout_1, b_c1, b_c2 are declared in __init__ but never used
    # in forward(), so they are initialized here but intentionally not applied.
    print("KERNEL_OK")
</pallas_src>

<mosaic_0001>
module attributes {stable_mosaic.version = 11 : i64} {
  func.func @_episodic_attn_kernel(%arg0: i32, %arg1: memref<32x7168xf32, #tpu.memory_space<vmem>>, %arg2: memref<1x1x7168xf32, #tpu.memory_space<vmem>>, %arg3: memref<32x1xf32, #tpu.memory_space<vmem>>, %arg4: memref<1x1x128xf32, #tpu.memory_space<vmem>>) attributes {dimension_semantics = [#tpu.dimension_semantics<parallel>], iteration_bounds = array<i64: 4>, scalar_prefetch = 0 : i64, scratch_operands = 0 : i64, tpu.core_type = #tpu.core_type<tc>, window_params = [{pipeline_mode = #tpu.pipeline_mode<synchronous>, transform_indices = @transform_0, window_bounds = array<i64: 32, 7168>}, {transform_indices = @transform_1, window_bounds = array<i64: 1, 1, 7168>}, {pipeline_mode = #tpu.pipeline_mode<synchronous>, transform_indices = @transform_2, window_bounds = array<i64: 32, 1>}, {transform_indices = @transform_3, window_bounds = array<i64: 1, 1, 128>}]} {
    %c0 = arith.constant 0 : index
    %c0_0 = arith.constant 0 : index
    %0 = vector.load %arg1[%c0, %c0_0] : memref<32x7168xf32, #tpu.memory_space<vmem>>, vector<32x7168xf32>
    %c0_1 = arith.constant 0 : index
    %c0_2 = arith.constant 0 : index
    %c0_3 = arith.constant 0 : index
    %1 = vector.load %arg2[%c0_1, %c0_2, %c0_3] : memref<1x1x7168xf32, #tpu.memory_space<vmem>>, vector<1x1x7168xf32>
    %2 = vector.shape_cast %1 : vector<1x1x7168xf32> to vector<1x7168xf32>
    %3 = vector.broadcast %2 : vector<1x7168xf32> to vector<32x7168xf32>
    %4 = arith.mulf %0, %3 : vector<32x7168xf32>
    %cst = arith.constant dense<0.000000e+00> : vector<32xf32>
    %5 = vector.multi_reduction <add>, %4, %cst [1] : vector<32x7168xf32> to vector<32xf32>
    %6 = vector.shape_cast %5 : vector<32xf32> to vector<32x1xf32>
    %7 = math.tanh %6 : vector<32x1xf32>
    %c0_4 = arith.constant 0 : index
    %c0_5 = arith.constant 0 : index
    %8 = vector.load %arg3[%c0_4, %c0_5] : memref<32x1xf32, #tpu.memory_space<vmem>>, vector<32x1xf32>
    %9 = arith.mulf %8, %7 : vector<32x1xf32>
    %cst_6 = arith.constant dense<0.000000e+00> : vector<1xf32>
    %10 = vector.multi_reduction <add>, %9, %cst_6 [0] : vector<32x1xf32> to vector<1xf32>
    %11 = vector.shape_cast %10 : vector<1xf32> to vector<1x1xf32>
    %12 = vector.shape_cast %11 : vector<1x1xf32> to vector<1x1x1xf32>
    %13 = vector.shape_cast %12 : vector<1x1x1xf32> to vector<1x1x1xf32>
    %14 = vector.broadcast %13 : vector<1x1x1xf32> to vector<1x1x128xf32>
    %c0_7 = arith.constant 0 : index
    %c0_8 = arith.constant 0 : index
    %c0_9 = arith.constant 0 : index
    %15 = vector.load %arg4[%c0_7, %c0_8, %c0_9] : memref<1x1x128xf32, #tpu.memory_space<vmem>>, vector<1x1x128xf32>
    tpu.vector_store %arg4[%c0_7, %c0_8, %c0_9], %14 {strides = array<i32>} : memref<1x1x128xf32, #tpu.memory_space<vmem>>, vector<1x1x128xf32>,
    return
  }
  func.func @transform_0(%arg0: i32) -> (i32, i32) {
    %c0_i32 = arith.constant 0 : i32
    %c0_i32_0 = arith.constant 0 : i32
    %c0_i32_1 = arith.constant 0 : i32
    return %c0_i32, %c0_i32_0 : i32, i32
  }
  func.func @transform_1(%arg0: i32) -> (i32, i32, i32) {
    %c0_i32 = arith.constant 0 : i32
    %c0_i32_0 = arith.constant 0 : i32
    %c0_i32_1 = arith.constant 0 : i32
    return %arg0, %c0_i32, %c0_i32_0 : i32, i32, i32
  }
  func.func @transform_2(%arg0: i32) -> (i32, i32) {
    %c0_i32 = arith.constant 0 : i32
    %c0_i32_0 = arith.constant 0 : i32
    %c0_i32_1 = arith.constant 0 : i32
    return %c0_i32, %c0_i32_0 : i32, i32
  }
  func.func @transform_3(%arg0: i32) -> (i32, i32, i32) {
    %c0_i32 = arith.constant 0 : i32
    %c0_i32_0 = arith.constant 0 : i32
    %c0_i32_1 = arith.constant 0 : i32
    return %arg0, %c0_i32, %c0_i32_0 : i32, i32, i32
  }
}

</mosaic_0001>

<llo_original>
// kernel: tpu_custom_call.1
$region0: #{tpu_custom_call.1}
  #allocation0 [shape = 'u32[]', space=smem, size = 0x4, offset = 0x4, fixed_abs, tag = 'smem constant byte address 0x4 - core index']
  #allocation1 [shape = 'u32[144,128]{1,0:T(1,128)}', space=vmem, size = 0x12000, scoped, tag = 'internal scratch']
  %s0 = inlined_call_operand.hbm [shape: f32[32,7168], index: 0, kind: input, shape index: {}]
  %s1 = inlined_call_operand.hbm [shape: f32[4,1,7168], index: 1, kind: input, shape index: {}]
  %s2 = inlined_call_operand.vmem [shape: f32[32,1], index: 2, kind: input, shape index: {}]
  %s3 = inlined_call_operand.hbm [shape: f32[4,1,128], index: 3, kind: output, shape index: {}]
  %s4 = sld [smem:[#allocation0]]
  $region53: #{tpu_custom_call.1} parent=0
    _
  %s6 = ssub.s32 1, %s4
  %s7 = scalar_select 0, %s6, %s4
  $region1: #{tpu_custom_call.1} parent=0
    #allocation2 [shape = 'u8[917504]{0}', space=vmem, size = 0xe0000, scoped, tag = 'input window, operand 0, single buffered']
    #allocation3 [shape = 's32[2]{0}', space=sflag, size = 0x8, scoped, tag = 'scoped memory for tpu_custom_call.1']
    #allocation4 [shape = 's32[2]{0}', space=sflag, size = 0x8, scoped, tag = 'scoped memory for tpu_custom_call.1']
    #allocation5 [shape = 'u8[57344]{0}', space=vmem, size = 0xe000, scoped, tag = 'input window, operand 1']
    #allocation6 [shape = 's32[2]{0}', space=sflag, size = 0x8, scoped, tag = 'scoped memory for tpu_custom_call.1']
    #allocation7 [shape = 'u8[1024]{0}', space=vmem, size = 0x400, scoped, tag = 'output window, operand 0']
    %8 = vsyncpa [#allocation3], 0
    %9 = vsyncpa [#allocation6], 0
    %s10 = scalar_lea.sflag [#allocation6], 1
    %11 = vsyncpa %s10, 0
    %12 = vsyncpa [#allocation4], 0
    %s13 = scalar_lea.sflag [#allocation4], 1
    %14 = vsyncpa %s13, 0
    loop: start=0, step=1, limit=6
    $region2: #{tpu_custom_call.1} parent=1 // loop_pre_header
      _
    $region3: #{tpu_custom_call.1} parent=1 // loop_header
      %s16 = sphi 0, %s20
      %p17 = scmp.ge.s32.totalorder %s16, 6
      %s24 = sphi 0, %s24
      %s26 = sphi 0, %s24
      %s27 = sphi 0, %s26
      %s41 = sphi 0, %s27
      %s47 = sphi 0, %s49
      %s50 = sphi 0, %s47
      %s51 = sphi 0, %s50
      %s67 = sphi 0, %s51
      %s71 = sphi 0, %s71
      %s73 = sphi 0, %s71
      %s74 = sphi 0, %s73
      %s88 = sphi 0, %s74
      %s94 = sphi 0, %s96
      %s97 = sphi 0, %s94
      %s98 = sphi 0, %s97
      %s114 = sphi 0, %s98
    $region4: #{tpu_custom_call.1} parent=1 // loop_header_branch
      %19 = sbr.rel (%p17) target = $region8
    $region5: #{tpu_custom_call.1} parent=1 // loop_body
      %s21 = ssub.s32 %s16, 1
      %s22 = ssub.s32 %s16, 2
      %s23 = sadd.s32 %s16, 1
      %s25 = sadd.s32 %s24, 1
      %p28 = scmp.eq.s32.totalorder %s16, 3
      %p29 = scmp.ne.s32.totalorder %s24, %s26
      %p30 = scmp.eq.s32.totalorder %s16, 0
      %p31 = por %p29, %p30
      %p32 = scmp.ne.s32.totalorder %s24, %s26
      %p33 = scmp.eq.s32.totalorder %s21, 3
      %p34 = por %p32, %p33
      %p35 = scmp.ne.s32.totalorder %s26, %s27
      %p36 = scmp.eq.s32.totalorder %s21, 0
      %p37 = por %p35, %p36
      %p38 = scmp.ne.s32.totalorder %s26, %s27
      %p39 = scmp.eq.s32.totalorder %s22, 3
      %p40 = por %p38, %p39
      %p42 = scmp.ne.s32.totalorder %s27, %s41
      %p43 = scmp.eq.s32.totalorder %s22, 0
      %p44 = por %p42, %p43
      %s45 = ssub.s32 %s16, %s23
      %p46 = scmp.eq.s32.totalorder %s45, 0
      %s48 = sadd.s32 %s47, 1
      %s49 = scalar_select %p46, %s47, %s48
      %p52 = pneg %p46
      %p53 = scmp.eq.s32.totalorder %s16, 3
      %p54 = por %p52, %p53
      %p55 = scmp.ne.s32.totalorder %s47, %s50
      %p56 = scmp.eq.s32.totalorder %s16, 0
      %p57 = por %p55, %p56
      %p58 = scmp.ne.s32.totalorder %s47, %s50
      %p59 = scmp.eq.s32.totalorder %s21, 3
      %p60 = por %p58, %p59
      %p61 = scmp.ne.s32.totalorder %s50, %s51
      %p62 = scmp.eq.s32.totalorder %s21, 0
      %p63 = por %p61, %p62
      %p64 = scmp.ne.s32.totalorder %s50, %s51
      %p65 = scmp.eq.s32.totalorder %s22, 3
      %p66 = por %p64, %p65
      %p68 = scmp.ne.s32.totalorder %s51, %s67
      %p69 = scmp.eq.s32.totalorder %s22, 0
      %p70 = por %p68, %p69
      %s72 = sadd.s32 %s71, 1
      %p75 = scmp.eq.s32.totalorder %s16, 3
      %p76 = scmp.ne.s32.totalorder %s71, %s73
      %p77 = scmp.eq.s32.totalorder %s16, 0
      %p78 = por %p76, %p77
      %p79 = scmp.ne.s32.totalorder %s71, %s73
      %p80 = scmp.eq.s32.totalorder %s21, 3
      %p81 = por %p79, %p80
      %p82 = scmp.ne.s32.totalorder %s73, %s74
      %p83 = scmp.eq.s32.totalorder %s21, 0
      %p84 = por %p82, %p83
      %p85 = scmp.ne.s32.totalorder %s73, %s74
      %p86 = scmp.eq.s32.totalorder %s22, 3
      %p87 = por %p85, %p86
      %p89 = scmp.ne.s32.totalorder %s74, %s88
      %p90 = scmp.eq.s32.totalorder %s22, 0
      %p91 = por %p89, %p90
      %s92 = ssub.s32 %s16, %s23
      %p93 = scmp.eq.s32.totalorder %s92, 0
      %s95 = sadd.s32 %s94, 1
      %s96 = scalar_select %p93, %s94, %s95
      %p99 = pneg %p93
      %p100 = scmp.eq.s32.totalorder %s16, 3
      %p101 = por %p99, %p100
      %p102 = scmp.ne.s32.totalorder %s94, %s97
      %p103 = scmp.eq.s32.totalorder %s16, 0
      %p104 = por %p102, %p103
      %p105 = scmp.ne.s32.totalorder %s94, %s97
      %p106 = scmp.eq.s32.totalorder %s21, 3
      %p107 = por %p105, %p106
      %p108 = scmp.ne.s32.totalorder %s97, %s98
      %p109 = scmp.eq.s32.totalorder %s21, 0
      %p110 = por %p108, %p109
      %p111 = scmp.ne.s32.totalorder %s97, %s98
      %p112 = scmp.eq.s32.totalorder %s22, 3
      %p113 = por %p111, %p112
      %p115 = scmp.ne.s32.totalorder %s98, %s114
      %p116 = scmp.eq.s32.totalorder %s22, 0
      %p117 = por %p115, %p116
      %p118 = scmp.le.s32.totalorder 1, %s16
      %p119 = scmp.lt.s32.totalorder %s16, 5
      %p120 = pnand %p118, %p119
      %p121 = pneg %p120
      // Predicated region
      $region9: #{tpu_custom_call.1} parent=5 // pred_check
        _
      $region10: #{tpu_custom_call.1} parent=5 // pred_check_branch
        %123 = sbr.rel (%p120) target = $region12
      $region11: #{tpu_custom_call.1} parent=5 // pred_region
        %s124 = ssub.s32 %s16, 1
        // Predicated region
        $region13: #{tpu_custom_call.1} parent=11 // pred_check
          %p125 = pneg %p37
        $region14: #{tpu_custom_call.1} parent=11 // pred_check_branch
          %127 = sbr.rel (%p125) target = $region16
        $region15: #{tpu_custom_call.1} parent=11 // pred_region
          %s129 = ssub.s32 28672, 28672
          %130 = vsyncadd [#allocation3], %s129
          %s131 = sshll.u32 [#allocation2], 4
          %s132 = int_to_ptr.vmem [resolvable:$true] %s131
          %137 = dma.hbm_to_vmem [thread:$0]  %s0, 28672, %s132, [#allocation3], 7168, 7168, 448
        $region16: #{tpu_custom_call.1} parent=11 // pred_fallthru
          _
        // Predicated region
        $region17: #{tpu_custom_call.1} parent=11 // pred_check
          %p138 = pneg %p84
        $region18: #{tpu_custom_call.1} parent=11 // pred_check_branch
          %140 = sbr.rel (%p138) target = $region20
        $region19: #{tpu_custom_call.1} parent=11 // pred_region
          _
        $region20: #{tpu_custom_call.1} parent=11 // pred_fallthru
          _
      $region12: #{tpu_custom_call.1} parent=5 // pred_fallthru
        _
      %p141 = scmp.lt.s32.totalorder %s16, 4
      // Predicated region
      $region21: #{tpu_custom_call.1} parent=5 // pred_check
        %p142 = pneg %p141
      $region22: #{tpu_custom_call.1} parent=5 // pred_check_branch
        %144 = sbr.rel (%p142) target = $region24
      $region23: #{tpu_custom_call.1} parent=5 // pred_region
        // Predicated region
        $region25: #{tpu_custom_call.1} parent=23 // pred_check
          %p145 = pneg %p57
        $region26: #{tpu_custom_call.1} parent=23 // pred_check_branch
          %147 = sbr.rel (%p145) target = $region28
        $region27: #{tpu_custom_call.1} parent=23 // pred_region
          %s148 = sand.u32 %s47, 1
          %s149 = scalar_lea.sflag [#allocation6], %s148
          %s150 = sand.u32 %s47, 1
          %s151 = smul.addr %s150, 56
          %s152 = scalar_lea.vmem [#allocation5], %s151
          %s154 = ssub.s32 896, 896
          %155 = vsyncadd %s149, %s154
          %s156 = smul.addr %s16, 56
          %s157 = smul.addr %s156, 16
          %s158 = scalar_lea.hbm %s1, %s157
          %s160 = sshll.u32 %s152, 4
          %s161 = int_to_ptr.vmem [resolvable:$true] %s160
          %163 = dma.hbm_to_vmem [thread:$0]  %s158, 896, %s161, %s149
        $region28: #{tpu_custom_call.1} parent=23 // pred_fallthru
          _
      $region24: #{tpu_custom_call.1} parent=5 // pred_fallthru
        _
      %p164 = scmp.le.s32.totalorder 1, %s16
      %p165 = scmp.lt.s32.totalorder %s16, 5
      %p166 = pnand %p164, %p165
      %p167 = pneg %p166
      // Predicated region
      $region29: #{tpu_custom_call.1} parent=5 // pred_check
        _
      $region30: #{tpu_custom_call.1} parent=5 // pred_check_branch
        %169 = sbr.rel (%p166) target = $region32
      $region31: #{tpu_custom_call.1} parent=5 // pred_region
        %s170 = ssub.s32 %s16, 1
        // Predicated region
        $region33: #{tpu_custom_call.1} parent=31 // pred_check
          %p171 = pneg %p37
        $region34: #{tpu_custom_call.1} parent=31 // pred_check_branch
          %173 = sbr.rel (%p171) target = $region36
        $region35: #{tpu_custom_call.1} parent=31 // pred_region
          %174 = dma.done [#allocation3], 28672
        $region36: #{tpu_custom_call.1} parent=31 // pred_fallthru
          _
        %s175 = sand.u32 %s50, 1
        %s176 = scalar_lea.sflag [#allocation6], %s175
        %s177 = sand.u32 %s50, 1
        %s178 = smul.addr %s177, 56
        %s179 = scalar_lea.vmem [#allocation5], %s178
        // Predicated region
        $region37: #{tpu_custom_call.1} parent=31 // pred_check
          %p180 = pneg %p63
        $region38: #{tpu_custom_call.1} parent=31 // pred_check_branch
          %182 = sbr.rel (%p180) target = $region40
        $region39: #{tpu_custom_call.1} parent=31 // pred_region
          %183 = dma.done %s176, 896
        $region40: #{tpu_custom_call.1} parent=31 // pred_fallthru
          _
        %p184 = pneg %p37
        %p185 = pneg %p34
        %s186 = sand.u32 %s50, 1
        %s187 = scalar_lea.sflag [#allocation6], %s186
        %s188 = sand.u32 %s50, 1
        %s189 = smul.addr %s188, 56
        %s190 = scalar_lea.vmem [#allocation5], %s189
        %p191 = pneg %p63
        %p192 = pneg %p60
        %p193 = pneg %p84
        %p194 = pneg %p81
        %p195 = pneg %p110
        %p196 = pneg %p107
        %s197 = sand.u32 %s97, 1
        %s198 = scalar_lea.sflag [#allocation4], %s197
        %s199 = sand.u32 %s97, 1
        %s200 = scalar_lea.vmem [#allocation7], %s199
        %v201 = vld [vmem:[#allocation2] sm:$0xff]
        %v202 = vld [vmem:[#allocation2 + $0x8] sm:$0xff]
        %v203 = vld [vmem:[#allocation2 + $0x10] sm:$0xff]
        %v204 = vld [vmem:[#allocation2 + $0x18] sm:$0xff]
        %v205 = vld [vmem:[#allocation2 + $0x20] sm:$0xff]
        %v206 = vld [vmem:[#allocation2 + $0x28] sm:$0xff]
        %v207 = vld [vmem:[#allocation2 + $0x30] sm:$0xff]
        %v208 = vld [vmem:[#allocation2 + $0x38] sm:$0xff]
        %v209 = vld [vmem:[#allocation2 + $0x40] sm:$0xff]
        %v210 = vld [vmem:[#allocation2 + $0x48] sm:$0xff]
        %v211 = vld [vmem:[#allocation2 + $0x50] sm:$0xff]
        %v212 = vld [vmem:[#allocation2 + $0x58] sm:$0xff]
        %v213 = vld [vmem:[#allocation2 + $0x60] sm:$0xff]
        %v214 = vld [vmem:[#allocation2 + $0x68] sm:$0xff]
        %v215 = vld [vmem:[#allocation2 + $0x70] sm:$0xff]
        %v216 = vld [vmem:[#allocation2 + $0x78] sm:$0xff]
        %v217 = vld [vmem:[#allocation2 + $0x80] sm:$0xff]
        %v218 = vld [vmem:[#allocation2 + $0x88] sm:$0xff]
        %v219 = vld [vmem:[#allocation2 + $0x90] sm:$0xff]
        %v220 = vld [vmem:[#allocation2 + $0x98] sm:$0xff]
        %v221 = vld [vmem:[#allocation2 + $0xa0] sm:$0xff]
        %v222 = vld [vmem:[#allocation2 + $0xa8] sm:$0xff]
        %v223 = vld [vmem:[#allocation2 + $0xb0] sm:$0xff]
        %v224 = vld [vmem:[#allocation2 + $0xb8] sm:$0xff]
        %v225 = vld [vmem:[#allocation2 + $0xc0] sm:$0xff]
        %v226 = vld [vmem:[#allocation2 + $0xc8] sm:$0xff]
        %v227 = vld [vmem:[#allocation2 + $0xd0] sm:$0xff]
        %v228 = vld [vmem:[#allocation2 + $0xd8] sm:$0xff]
        %v229 = vld [vmem:[#allocation2 + $0xe0] sm:$0xff]
        %v230 = vld [vmem:[#allocation2 + $0xe8] sm:$0xff]
        %v231 = vld [vmem:[#allocation2 + $0xf0] sm:$0xff]
        %v232 = vld [vmem:[#allocation2 + $0xf8] sm:$0xff]
        %v233 = vld [vmem:[#allocation2 + $0x100] sm:$0xff]
        %v234 = vld [vmem:[#allocation2 + $0x108] sm:$0xff]
        %v235 = vld [vmem:[#allocation2 + $0x110] sm:$0xff]
        %v236 = vld [vmem:[#allocation2 + $0x118] sm:$0xff]
        %v237 = vld [vmem:[#allocation2 + $0x120] sm:$0xff]
        %v238 = vld [vmem:[#allocation2 + $0x128] sm:$0xff]
        %v239 = vld [vmem:[#allocation2 + $0x130] sm:$0xff]
        %v240 = vld [vmem:[#allocation2 + $0x138] sm:$0xff]
        %v241 = vld [vmem:[#allocation2 + $0x140] sm:$0xff]
        %v242 = vld [vmem:[#allocation2 + $0x148] sm:$0xff]
        %v243 = vld [vmem:[#allocation2 + $0x150] sm:$0xff]
        %v244 = vld [vmem:[#allocation2 + $0x158] sm:$0xff]
        %v245 = vld [vmem:[#allocation2 + $0x160] sm:$0xff]
        %v246 = vld [vmem:[#allocation2 + $0x168] sm:$0xff]
        %v247 = vld [vmem:[#allocation2 + $0x170] sm:$0xff]
        %v248 = vld [vmem:[#allocation2 + $0x178] sm:$0xff]
        %v249 = vld [vmem:[#allocation2 + $0x180] sm:$0xff]
        %v250 = vld [vmem:[#allocation2 + $0x188] sm:$0xff]
        %v251 = vld [vmem:[#allocation2 + $0x190] sm:$0xff]
        %v252 = vld [vmem:[#allocation2 + $0x198] sm:$0xff]
        %v253 = vld [vmem:[#allocation2 + $0x1a0] sm:$0xff]
        %v254 = vld [vmem:[#allocation2 + $0x1a8] sm:$0xff]
        %v255 = vld [vmem:[#allocation2 + $0x1b0] sm:$0xff]
        %v256 = vld [vmem:[#allocation2 + $0x1b8] sm:$0xff]
        %v257 = vld [vmem:[#allocation2 + $0x1c0] sm:$0xff]
        %v258 = vld [vmem:[#allocation2 + $0x1c8] sm:$0xff]
        %v259 = vld [vmem:[#allocation2 + $0x1d0] sm:$0xff]
        %v260 = vld [vmem:[#allocation2 + $0x1d8] sm:$0xff]
        %v261 = vld [vmem:[#allocation2 + $0x1e0] sm:$0xff]
        %v262 = vld [vmem:[#allocation2 + $0x1e8] sm:$0xff]
        %v263 = vld [vmem:[#allocation2 + $0x1f0] sm:$0xff]
        %v264 = vld [vmem:[#allocation2 + $0x1f8] sm:$0xff]
        %v265 = vld [vmem:[#allocation2 + $0x200] sm:$0xff]
        %v266 = vld [vmem:[#allocation2 + $0x208] sm:$0xff]
        %v267 = vld [vmem:[#allocation2 + $0x210] sm:$0xff]
        %v268 = vld [vmem:[#allocation2 + $0x218] sm:$0xff]
        %v269 = vld [vmem:[#allocation2 + $0x220] sm:$0xff]
        %v270 = vld [vmem:[#allocation2 + $0x228] sm:$0xff]
        %v271 = vld [vmem:[#allocation2 + $0x230] sm:$0xff]
        %v272 = vld [vmem:[#allocation2 + $0x238] sm:$0xff]
        %v273 = vld [vmem:[#allocation2 + $0x240] sm:$0xff]
        %v274 = vld [vmem:[#allocation2 + $0x248] sm:$0xff]
        %v275 = vld [vmem:[#allocation2 + $0x250] sm:$0xff]
        %v276 = vld [vmem:[#allocation2 + $0x258] sm:$0xff]
        %v277 = vld [vmem:[#allocation2 + $0x260] sm:$0xff]
        %v278 = vld [vmem:[#allocation2 + $0x268] sm:$0xff]
        %v279 = vld [vmem:[#allocation2 + $0x270] sm:$0xff]
        %v280 = vld [vmem:[#allocation2 + $0x278] sm:$0xff]
        %v281 = vld [vmem:[#allocation2 + $0x280] sm:$0xff]
        %v282 = vld [vmem:[#allocation2 + $0x288] sm:$0xff]
        %v283 = vld [vmem:[#allocation2 + $0x290] sm:$0xff]
        %v284 = vld [vmem:[#allocation2 + $0x298] sm:$0xff]
        %v285 = vld [vmem:[#allocation2 + $0x2a0] sm:$0xff]
        %v286 = vld [vmem:[#allocation2 + $0x2a8] sm:$0xff]
        %v287 = vld [vmem:[#allocation2 + $0x2b0] sm:$0xff]
        %v288 = vld [vmem:[#allocation2 + $0x2b8] sm:$0xff]
        %v289 = vld [vmem:[#allocation2 + $0x2c0] sm:$0xff]
        %v290 = vld [vmem:[#allocation2 + $0x2c8] sm:$0xff]
        %v291 = vld [vmem:[#allocation2 + $0x2d0] sm:$0xff]
        %v292 = vld [vmem:[#allocation2 + $0x2d8] sm:$0xff]
        %v293 = vld [vmem:[#allocation2 + $0x2e0] sm:$0xff]
        %v294 = vld [vmem:[#allocation2 + $0x2e8] sm:$0xff]
        %v295 = vld [vmem:[#allocation2 + $0x2f0] sm:$0xff]
        %v296 = vld [vmem:[#allocation2 + $0x2f8] sm:$0xff]
        %v297 = vld [vmem:[#allocation2 + $0x300] sm:$0xff]
        %v298 = vld [vmem:[#allocation2 + $0x308] sm:$0xff]
        %v299 = vld [vmem:[#allocation2 + $0x310] sm:$0xff]
        %v300 = vld [vmem:[#allocation2 + $0x318] sm:$0xff]
        %v301 = vld [vmem:[#allocation2 + $0x320] sm:$0xff]
        %v302 = vld [vmem:[#allocation2 + $0x328] sm:$0xff]
        %v303 = vld [vmem:[#allocation2 + $0x330] sm:$0xff]
        %v304 = vld [vmem:[#allocation2 + $0x338] sm:$0xff]
        %v305 = vld [vmem:[#allocation2 + $0x340] sm:$0xff]
        %v306 = vld [vmem:[#allocation2 + $0x348] sm:$0xff]
        %v307 = vld [vmem:[#allocation2 + $0x350] sm:$0xff]
        %v308 = vld [vmem:[#allocation2 + $0x358] sm:$0xff]
        %v309 = vld [vmem:[#allocation2 + $0x360] sm:$0xff]
        %v310 = vld [vmem:[#allocation2 + $0x368] sm:$0xff]
        %v311 = vld [vmem:[#allocation2 + $0x370] sm:$0xff]
        %v312 = vld [vmem:[#allocation2 + $0x378] sm:$0xff]
        %v313 = vld [vmem:[#allocation2 + $0x380] sm:$0xff]
        %v314 = vld [vmem:[#allocation2 + $0x388] sm:$0xff]
        %v315 = vld [vmem:[#allocation2 + $0x390] sm:$0xff]
        %v316 = vld [vmem:[#allocation2 + $0x398] sm:$0xff]
        %v317 = vld [vmem:[#allocation2 + $0x3a0] sm:$0xff]
        %v318 = vld [vmem:[#allocation2 + $0x3a8] sm:$0xff]
        %v319 = vld [vmem:[#allocation2 + $0x3b0] sm:$0xff]
        %v320 = vld [vmem:[#allocation2 + $0x3b8] sm:$0xff]
        %v321 = vld [vmem:[#allocation2 + $0x3c0] sm:$0xff]
        %v322 = vld [vmem:[#allocation2 + $0x3c8] sm:$0xff]
        %v323 = vld [vmem:[#allocation2 + $0x3d0] sm:$0xff]
        %v324 = vld [vmem:[#allocation2 + $0x3d8] sm:$0xff]
        %v325 = vld [vmem:[#allocation2 + $0x3e0] sm:$0xff]
        %v326 = vld [vmem:[#allocation2 + $0x3e8] sm:$0xff]
        %v327 = vld [vmem:[#allocation2 + $0x3f0] sm:$0xff]
        %v328 = vld [vmem:[#allocation2 + $0x3f8] sm:$0xff]
        %v329 = vld [vmem:[#allocation2 + $0x400] sm:$0xff]
        %v330 = vld [vmem:[#allocation2 + $0x408] sm:$0xff]
        %v331 = vld [vmem:[#allocation2 + $0x410] sm:$0xff]
        %v332 = vld [vmem:[#allocation2 + $0x418] sm:$0xff]
        %v333 = vld [vmem:[#allocation2 + $0x420] sm:$0xff]
        %v334 = vld [vmem:[#allocation2 + $0x428] sm:$0xff]
        %v335 = vld [vmem:[#allocation2 + $0x430] sm:$0xff]
        %v336 = vld [vmem:[#allocation2 + $0x438] sm:$0xff]
        %v337 = vld [vmem:[#allocation2 + $0x440] sm:$0xff]
        %v338 = vld [vmem:[#allocation2 + $0x448] sm:$0xff]
        %v339 = vld [vmem:[#allocation2 + $0x450] sm:$0xff]
        %v340 = vld [vmem:[#allocation2 + $0x458] sm:$0xff]
        %v341 = vld [vmem:[#allocation2 + $0x460] sm:$0xff]
        %v342 = vld [vmem:[#allocation2 + $0x468] sm:$0xff]
        %v343 = vld [vmem:[#allocation2 + $0x470] sm:$0xff]
        %v344 = vld [vmem:[#allocation2 + $0x478] sm:$0xff]
        %v345 = vld [vmem:[#allocation2 + $0x480] sm:$0xff]
        %v346 = vld [vmem:[#allocation2 + $0x488] sm:$0xff]
        %v347 = vld [vmem:[#allocation2 + $0x490] sm:$0xff]
        %v348 = vld [vmem:[#allocation2 + $0x498] sm:$0xff]
        %v349 = vld [vmem:[#allocation2 + $0x4a0] sm:$0xff]
        %v350 = vld [vmem:[#allocation2 + $0x4a8] sm:$0xff]
        %v351 = vld [vmem:[#allocation2 + $0x4b0] sm:$0xff]
        %v352 = vld [vmem:[#allocation2 + $0x4b8] sm:$0xff]
        %v353 = vld [vmem:[#allocation2 + $0x4c0] sm:$0xff]
        %v354 = vld [vmem:[#allocation2 + $0x4c8] sm:$0xff]
        %v355 = vld [vmem:[#allocation2 + $0x4d0] sm:$0xff]
        %v356 = vld [vmem:[#allocation2 + $0x4d8] sm:$0xff]
        %v357 = vld [vmem:[#allocation2 + $0x4e0] sm:$0xff]
        %v358 = vld [vmem:[#allocation2 + $0x4e8] sm:$0xff]
        %v359 = vld [vmem:[#allocation2 + $0x4f0] sm:$0xff]
        %v360 = vld [vmem:[#allocation2 + $0x4f8] sm:$0xff]
        %v361 = vld [vmem:[#allocation2 + $0x500] sm:$0xff]
        %v362 = vld [vmem:[#allocation2 + $0x508] sm:$0xff]
        %v363 = vld [vmem:[#allocation2 + $0x510] sm:$0xff]
        %v364 = vld [vmem:[#allocation2 + $0x518] sm:$0xff]
        %v365 = vld [vmem:[#allocation2 + $0x520] sm:$0xff]
        %v366 = vld [vmem:[#allocation2 + $0x528] sm:$0xff]
        %v367 = vld [vmem:[#allocation2 + $0x530] sm:$0xff]
        %v368 = vld [vmem:[#allocation2 + $0x538] sm:$0xff]
        %v369 = vld [vmem:[#allocation2 + $0x540] sm:$0xff]
        %v370 = vld [vmem:[#allocation2 + $0x548] sm:$0xff]
        %v371 = vld [vmem:[#allocation2 + $0x550] sm:$0xff]
        %v372 = vld [vmem:[#allocation2 + $0x558] sm:$0xff]
        %v373 = vld [vmem:[#allocation2 + $0x560] sm:$0xff]
        %v374 = vld [vmem:[#allocation2 + $0x568] sm:$0xff]
        %v375 = vld [vmem:[#allocation2 + $0x570] sm:$0xff]
        %v376 = vld [vmem:[#allocation2 + $0x578] sm:$0xff]
        %v377 = vld [vmem:[#allocation2 + $0x580] sm:$0xff]
        %v378 = vld [vmem:[#allocation2 + $0x588] sm:$0xff]
        %v379 = vld [vmem:[#allocation2 + $0x590] sm:$0xff]
        %v380 = vld [vmem:[#allocation2 + $0x598] sm:$0xff]
        %v381 = vld [vmem:[#allocation2 + $0x5a0] sm:$0xff]
        %v382 = vld [vmem:[#allocation2 + $0x5a8] sm:$0xff]
        %v383 = vld [vmem:[#allocation2 + $0x5b0] sm:$0xff]
        %v384 = vld [vmem:[#allocation2 + $0x5b8] sm:$0xff]
        %v385 = vld [vmem:[#allocation2 + $0x5c0] sm:$0xff]
        %v386 = vld [vmem:[#allocation2 + $0x5c8] sm:$0xff]
        %v387 = vld [vmem:[#allocation2 + $0x5d0] sm:$0xff]
        %v388 = vld [vmem:[#allocation2 + $0x5d8] sm:$0xff]
        %v389 = vld [vmem:[#allocation2 + $0x5e0] sm:$0xff]
        %v390 = vld [vmem:[#allocation2 + $0x5e8] sm:$0xff]
        %v391 = vld [vmem:[#allocation2 + $0x5f0] sm:$0xff]
        %v392 = vld [vmem:[#allocation2 + $0x5f8] sm:$0xff]
        %v393 = vld [vmem:[#allocation2 + $0x600] sm:$0xff]
        %v394 = vld [vmem:[#allocation2 + $0x608] sm:$0xff]
        %v395 = vld [vmem:[#allocation2 + $0x610] sm:$0xff]
        %v396 = vld [vmem:[#allocation2 + $0x618] sm:$0xff]
        %v397 = vld [vmem:[#allocation2 + $0x620] sm:$0xff]
        %v398 = vld [vmem:[#allocation2 + $0x628] sm:$0xff]
        %v399 = vld [vmem:[#allocation2 + $0x630] sm:$0xff]
        %v400 = vld [vmem:[#allocation2 + $0x638] sm:$0xff]
        %v401 = vld [vmem:[#allocation2 + $0x640] sm:$0xff]
        %v402 = vld [vmem:[#allocation2 + $0x648] sm:$0xff]
        %v403 = vld [vmem:[#allocation2 + $0x650] sm:$0xff]
        %v404 = vld [vmem:[#allocation2 + $0x658] sm:$0xff]
        %v405 = vld [vmem:[#allocation2 + $0x660] sm:$0xff]
        %v406 = vld [vmem:[#allocation2 + $0x668] sm:$0xff]
        %v407 = vld [vmem:[#allocation2 + $0x670] sm:$0xff]
        %v408 = vld [vmem:[#allocation2 + $0x678] sm:$0xff]
        %v409 = vld [vmem:[#allocation2 + $0x680] sm:$0xff]
        %v410 = vld [vmem:[#allocation2 + $0x688] sm:$0xff]
        %v411 = vld [vmem:[#allocation2 + $0x690] sm:$0xff]
        %v412 = vld [vmem:[#allocation2 + $0x698] sm:$0xff]
        %v413 = vld [vmem:[#allocation2 + $0x6a0] sm:$0xff]
        %v414 = vld [vmem:[#allocation2 + $0x6a8] sm:$0xff]
        %v415 = vld [vmem:[#allocation2 + $0x6b0] sm:$0xff]
        %v416 = vld [vmem:[#allocation2 + $0x6b8] sm:$0xff]
        %v417 = vld [vmem:[#allocation2 + $0x6c0] sm:$0xff]
        %v418 = vld [vmem:[#allocation2 + $0x6c8] sm:$0xff]
        %v419 = vld [vmem:[#allocation2 + $0x6d0] sm:$0xff]
        %v420 = vld [vmem:[#allocation2 + $0x6d8] sm:$0xff]
        %v421 = vld [vmem:[#allocation2 + $0x6e0] sm:$0xff]
        %v422 = vld [vmem:[#allocation2 + $0x6e8] sm:$0xff]
        %v423 = vld [vmem:[#allocation2 + $0x6f0] sm:$0xff]
        %v424 = vld [vmem:[#allocation2 + $0x6f8] sm:$0xff]
        %v425 = vld [vmem:[%s179] sm:$0xff]
        %v426 = vld [vmem:[%s179 + $0x8] sm:$0xff]
        %v427 = vld [vmem:[%s179 + $0x10] sm:$0xff]
        %v428 = vld [vmem:[%s179 + $0x18] sm:$0xff]
        %v429 = vld [vmem:[%s179 + $0x20] sm:$0xff]
        %v430 = vld [vmem:[%s179 + $0x28] sm:$0xff]
        %v431 = vld [vmem:[%s179 + $0x30] sm:$0xff]
        %v439 = vlaneseq
        %v440 = vshrl.u32 %v439, 7
        %v441 = vsub.s32 0, %v440
        %v442 = vrot.slane %v425, %v441
        %v443 = vlaneseq
        %v444 = vshrl.u32 %v443, 7
        %v445 = vsub.s32 1, %v444
        %v446 = vrot.slane %v425, %v445
        %v447 = vlaneseq
        %v448 = vshrl.u32 %v447, 7
        %v449 = vsub.s32 2, %v448
        %v450 = vrot.slane %v425, %v449
        %v451 = vlaneseq
        %v452 = vshrl.u32 %v451, 7
        %v453 = vsub.s32 3, %v452
        %v454 = vrot.slane %v425, %v453
        %v455 = vlaneseq
        %v456 = vshrl.u32 %v455, 7
        %v457 = vsub.s32 4, %v456
        %v458 = vrot.slane %v425, %v457
        %v459 = vlaneseq
        %v460 = vshrl.u32 %v459, 7
        %v461 = vsub.s32 5, %v460
        %v462 = vrot.slane %v425, %v461
        %v463 = vlaneseq
        %v464 = vshrl.u32 %v463, 7
        %v465 = vsub.s32 6, %v464
        %v466 = vrot.slane %v425, %v465
        %v467 = vlaneseq
        %v468 = vshrl.u32 %v467, 7
        %v469 = vsub.s32 7, %v468
        %v470 = vrot.slane %v425, %v469
        %v471 = vlaneseq
        %v472 = vshrl.u32 %v471, 7
        %v473 = vsub.s32 0, %v472
        %v474 = vrot.slane %v426, %v473
        %v475 = vlaneseq
        %v476 = vshrl.u32 %v475, 7
        %v477 = vsub.s32 1, %v476
        %v478 = vrot.slane %v426, %v477
        %v479 = vlaneseq
        %v480 = vshrl.u32 %v479, 7
        %v481 = vsub.s32 2, %v480
        %v482 = vrot.slane %v426, %v481
        %v483 = vlaneseq
        %v484 = vshrl.u32 %v483, 7
        %v485 = vsub.s32 3, %v484
        %v486 = vrot.slane %v426, %v485
        %v487 = vlaneseq
        %v488 = vshrl.u32 %v487, 7
        %v489 = vsub.s32 4, %v488
        %v490 = vrot.slane %v426, %v489
        %v491 = vlaneseq
        %v492 = vshrl.u32 %v491, 7
        %v493 = vsub.s32 5, %v492
        %v494 = vrot.slane %v426, %v493
        %v495 = vlaneseq
        %v496 = vshrl.u32 %v495, 7
        %v497 = vsub.s32 6, %v496
        %v498 = vrot.slane %v426, %v497
        %v499 = vlaneseq
        %v500 = vshrl.u32 %v499, 7
        %v501 = vsub.s32 7, %v500
        %v502 = vrot.slane %v426, %v501
        %v503 = vlaneseq
        %v504 = vshrl.u32 %v503, 7
        %v505 = vsub.s32 0, %v504
        %v506 = vrot.slane %v427, %v505
        %v507 = vlaneseq
        %v508 = vshrl.u32 %v507, 7
        %v509 = vsub.s32 1, %v508
        %v510 = vrot.slane %v427, %v509
        %v511 = vlaneseq
        %v512 = vshrl.u32 %v511, 7
        %v513 = vsub.s32 2, %v512
        %v514 = vrot.slane %v427, %v513
        %v515 = vlaneseq
        %v516 = vshrl.u32 %v515, 7
        %v517 = vsub.s32 3, %v516
        %v518 = vrot.slane %v427, %v517
        %v519 = vlaneseq
        %v520 = vshrl.u32 %v519, 7
        %v521 = vsub.s32 4, %v520
        %v522 = vrot.slane %v427, %v521
        %v523 = vlaneseq
        %v524 = vshrl.u32 %v523, 7
        %v525 = vsub.s32 5, %v524
        %v526 = vrot.slane %v427, %v525
        %v527 = vlaneseq
        %v528 = vshrl.u32 %v527, 7
        %v529 = vsub.s32 6, %v528
        %v530 = vrot.slane %v427, %v529
        %v531 = vlaneseq
        %v532 = vshrl.u32 %v531, 7
        %v533 = vsub.s32 7, %v532
        %v534 = vrot.slane %v427, %v533
        %v535 = vlaneseq
        %v536 = vshrl.u32 %v535, 7
        %v537 = vsub.s32 0, %v536
        %v538 = vrot.slane %v428, %v537
        %v539 = vlaneseq
        %v540 = vshrl.u32 %v539, 7
        %v541 = vsub.s32 1, %v540
        %v542 = vrot.slane %v428, %v541
        %v543 = vlaneseq
        %v544 = vshrl.u32 %v543, 7
        %v545 = vsub.s32 2, %v544
        %v546 = vrot.slane %v428, %v545
        %v547 = vlaneseq
        %v548 = vshrl.u32 %v547, 7
        %v549 = vsub.s32 3, %v548
        %v550 = vrot.slane %v428, %v549
        %v551 = vlaneseq
        %v552 = vshrl.u32 %v551, 7
        %v553 = vsub.s32 4, %v552
        %v554 = vrot.slane %v428, %v553
        %v555 = vlaneseq
        %v556 = vshrl.u32 %v555, 7
        %v557 = vsub.s32 5, %v556
        %v558 = vrot.slane %v428, %v557
        %v559 = vlaneseq
        %v560 = vshrl.u32 %v559, 7
        %v561 = vsub.s32 6, %v560
        %v562 = vrot.slane %v428, %v561
        %v563 = vlaneseq
        %v564 = vshrl.u32 %v563, 7
        %v565 = vsub.s32 7, %v564
        %v566 = vrot.slane %v428, %v565
        %v567 = vlaneseq
        %v568 = vshrl.u32 %v567, 7
        %v569 = vsub.s32 0, %v568
        %v570 = vrot.slane %v429, %v569
        %v571 = vlaneseq
        %v572 = vshrl.u32 %v571, 7
        %v573 = vsub.s32 1, %v572
        %v574 = vrot.slane %v429, %v573
        %v575 = vlaneseq
        %v576 = vshrl.u32 %v575, 7
        %v577 = vsub.s32 2, %v576
        %v578 = vrot.slane %v429, %v577
        %v579 = vlaneseq
        %v580 = vshrl.u32 %v579, 7
        %v581 = vsub.s32 3, %v580
        %v582 = vrot.slane %v429, %v581
        %v583 = vlaneseq
        %v584 = vshrl.u32 %v583, 7
        %v585 = vsub.s32 4, %v584
        %v586 = vrot.slane %v429, %v585
        %v587 = vlaneseq
        %v588 = vshrl.u32 %v587, 7
        %v589 = vsub.s32 5, %v588
        %v590 = vrot.slane %v429, %v589
        %v591 = vlaneseq
        %v592 = vshrl.u32 %v591, 7
        %v593 = vsub.s32 6, %v592
        %v594 = vrot.slane %v429, %v593
        %v595 = vlaneseq
        %v596 = vshrl.u32 %v595, 7
        %v597 = vsub.s32 7, %v596
        %v598 = vrot.slane %v429, %v597
        %v599 = vlaneseq
        %v600 = vshrl.u32 %v599, 7
        %v601 = vsub.s32 0, %v600
        %v602 = vrot.slane %v430, %v601
        %v603 = vlaneseq
        %v604 = vshrl.u32 %v603, 7
        %v605 = vsub.s32 1, %v604
        %v606 = vrot.slane %v430, %v605
        %v607 = vlaneseq
        %v608 = vshrl.u32 %v607, 7
        %v609 = vsub.s32 2, %v608
        %v610 = vrot.slane %v430, %v609
        %v611 = vlaneseq
        %v612 = vshrl.u32 %v611, 7
        %v613 = vsub.s32 3, %v612
        %v614 = vrot.slane %v430, %v613
        %v615 = vlaneseq
        %v616 = vshrl.u32 %v615, 7
        %v617 = vsub.s32 4, %v616
        %v618 = vrot.slane %v430, %v617
        %v619 = vlaneseq
        %v620 = vshrl.u32 %v619, 7
        %v621 = vsub.s32 5, %v620
        %v622 = vrot.slane %v430, %v621
        %v623 = vlaneseq
        %v624 = vshrl.u32 %v623, 7
        %v625 = vsub.s32 6, %v624
        %v626 = vrot.slane %v430, %v625
        %v627 = vlaneseq
        %v628 = vshrl.u32 %v627, 7
        %v629 = vsub.s32 7, %v628
        %v630 = vrot.slane %v430, %v629
        %v631 = vlaneseq
        %v632 = vshrl.u32 %v631, 7
        %v633 = vsub.s32 0, %v632
        %v634 = vrot.slane %v431, %v633
        %v635 = vlaneseq
        %v636 = vshrl.u32 %v635, 7
        %v637 = vsub.s32 1, %v636
        %v638 = vrot.slane %v431, %v637
        %v639 = vlaneseq
        %v640 = vshrl.u32 %v639, 7
        %v641 = vsub.s32 2, %v640
        %v642 = vrot.slane %v431, %v641
        %v643 = vlaneseq
        %v644 = vshrl.u32 %v643, 7
        %v645 = vsub.s32 3, %v644
        %v646 = vrot.slane %v431, %v645
        %v647 = vlaneseq
        %v648 = vshrl.u32 %v647, 7
        %v649 = vsub.s32 4, %v648
        %v650 = vrot.slane %v431, %v649
        %v651 = vlaneseq
        %v652 = vshrl.u32 %v651, 7
        %v653 = vsub.s32 5, %v652
        %v654 = vrot.slane %v431, %v653
        %v655 = vlaneseq
        %v656 = vshrl.u32 %v655, 7
        %v657 = vsub.s32 6, %v656
        %v658 = vrot.slane %v431, %v657
        %v659 = vlaneseq
        %v660 = vshrl.u32 %v659, 7
        %v661 = vsub.s32 7, %v660
        %v662 = vrot.slane %v431, %v661
        %v719 = vmul.f32 %v201, %v442
        %v720 = vmul.f32 %v202, %v446
        %v721 = vmul.f32 %v203, %v450
        %v722 = vmul.f32 %v204, %v454
        %v723 = vmul.f32 %v205, %v458
        %v724 = vmul.f32 %v206, %v462
        %v725 = vmul.f32 %v207, %v466
        %v726 = vmul.f32 %v208, %v470
        %v727 = vmul.f32 %v209, %v474
        %v728 = vmul.f32 %v210, %v478
        %v729 = vmul.f32 %v211, %v482
        %v730 = vmul.f32 %v212, %v486
        %v731 = vmul.f32 %v213, %v490
        %v732 = vmul.f32 %v214, %v494
        %v733 = vmul.f32 %v215, %v498
        %v734 = vmul.f32 %v216, %v502
        %v735 = vmul.f32 %v217, %v506
        %v736 = vmul.f32 %v218, %v510
        %v737 = vmul.f32 %v219, %v514
        %v738 = vmul.f32 %v220, %v518
        %v739 = vmul.f32 %v221, %v522
        %v740 = vmul.f32 %v222, %v526
        %v741 = vmul.f32 %v223, %v530
        %v742 = vmul.f32 %v224, %v534
        %v743 = vmul.f32 %v225, %v538
        %v744 = vmul.f32 %v226, %v542
        %v745 = vmul.f32 %v227, %v546
        %v746 = vmul.f32 %v228, %v550
        %v747 = vmul.f32 %v229, %v554
        %v748 = vmul.f32 %v230, %v558
        %v749 = vmul.f32 %v231, %v562
        %v750 = vmul.f32 %v232, %v566
        %v751 = vmul.f32 %v233, %v570
        %v752 = vmul.f32 %v234, %v574
        %v753 = vmul.f32 %v235, %v578
        %v754 = vmul.f32 %v236, %v582
        %v755 = vmul.f32 %v237, %v586
        %v756 = vmul.f32 %v238, %v590
        %v757 = vmul.f32 %v239, %v594
        %v758 = vmul.f32 %v240, %v598
        %v759 = vmul.f32 %v241, %v602
        %v760 = vmul.f32 %v242, %v606
        %v761 = vmul.f32 %v243, %v610
        %v762 = vmul.f32 %v244, %v614
        %v763 = vmul.f32 %v245, %v618
        %v764 = vmul.f32 %v246, %v622
        %v765 = vmul.f32 %v247, %v626
        %v766 = vmul.f32 %v248, %v630
        %v767 = vmul.f32 %v249, %v634
        %v768 = vmul.f32 %v250, %v638
        %v769 = vmul.f32 %v251, %v642
        %v770 = vmul.f32 %v252, %v646
        %v771 = vmul.f32 %v253, %v650
        %v772 = vmul.f32 %v254, %v654
        %v773 = vmul.f32 %v255, %v658
        %v774 = vmul.f32 %v256, %v662
        %v775 = vmul.f32 %v257, %v442
        %v776 = vmul.f32 %v258, %v446
        %v777 = vmul.f32 %v259, %v450
        %v778 = vmul.f32 %v260, %v454
        %v779 = vmul.f32 %v261, %v458
        %v780 = vmul.f32 %v262, %v462
        %v781 = vmul.f32 %v263, %v466
        %v782 = vmul.f32 %v264, %v470
        %v783 = vmul.f32 %v265, %v474
        %v784 = vmul.f32 %v266, %v478
        %v785 = vmul.f32 %v267, %v482
        %v786 = vmul.f32 %v268, %v486
        %v787 = vmul.f32 %v269, %v490
        %v788 = vmul.f32 %v270, %v494
        %v789 = vmul.f32 %v271, %v498
        %v790 = vmul.f32 %v272, %v502
        %v791 = vmul.f32 %v273, %v506
        %v792 = vmul.f32 %v274, %v510
        %v793 = vmul.f32 %v275, %v514
        %v794 = vmul.f32 %v276, %v518
        %v795 = vmul.f32 %v277, %v522
        %v796 = vmul.f32 %v278, %v526
        %v797 = vmul.f32 %v279, %v530
        %v798 = vmul.f32 %v280, %v534
        %v799 = vmul.f32 %v281, %v538
        %v800 = vmul.f32 %v282, %v542
        %v801 = vmul.f32 %v283, %v546
        %v802 = vmul.f32 %v284, %v550
        %v803 = vmul.f32 %v285, %v554
        %v804 = vmul.f32 %v286, %v558
        %v805 = vmul.f32 %v287, %v562
        %v806 = vmul.f32 %v288, %v566
        %v807 = vmul.f32 %v289, %v570
        %v808 = vmul.f32 %v290, %v574
        %v809 = vmul.f32 %v291, %v578
        %v810 = vmul.f32 %v292, %v582
        %v811 = vmul.f32 %v293, %v586
        %v812 = vmul.f32 %v294, %v590
        %v813 = vmul.f32 %v295, %v594
        %v814 = vmul.f32 %v296, %v598
        %v815 = vmul.f32 %v297, %v602
        %v816 = vmul.f32 %v298, %v606
        %v817 = vmul.f32 %v299, %v610
        %v818 = vmul.f32 %v300, %v614
        %v819 = vmul.f32 %v301, %v618
        %v820 = vmul.f32 %v302, %v622
        %v821 = vmul.f32 %v303, %v626
        %v822 = vmul.f32 %v304, %v630
        %v823 = vmul.f32 %v305, %v634
        %v824 = vmul.f32 %v306, %v638
        %v825 = vmul.f32 %v307, %v642
        %v826 = vmul.f32 %v308, %v646
        %v827 = vmul.f32 %v309, %v650
        %v828 = vmul.f32 %v310, %v654
        %v829 = vmul.f32 %v311, %v658
        %v830 = vmul.f32 %v312, %v662
        %v831 = vmul.f32 %v313, %v442
        %v832 = vmul.f32 %v314, %v446
        %v833 = vmul.f32 %v315, %v450
        %v834 = vmul.f32 %v316, %v454
        %v835 = vmul.f32 %v317, %v458
        %v836 = vmul.f32 %v318, %v462
        %v837 = vmul.f32 %v319, %v466
        %v838 = vmul.f32 %v320, %v470
        %v839 = vmul.f32 %v321, %v474
        %v840 = vmul.f32 %v322, %v478
        %v841 = vmul.f32 %v323, %v482
        %v842 = vmul.f32 %v324, %v486
        %v843 = vmul.f32 %v325, %v490
        %v844 = vmul.f32 %v326, %v494
        %v845 = vmul.f32 %v327, %v498
        %v846 = vmul.f32 %v328, %v502
        %v847 = vmul.f32 %v329, %v506
        %v848 = vmul.f32 %v330, %v510
        %v849 = vmul.f32 %v331, %v514
        %v850 = vmul.f32 %v332, %v518
        %v851 = vmul.f32 %v333, %v522
        %v852 = vmul.f32 %v334, %v526
        %v853 = vmul.f32 %v335, %v530
        %v854 = vmul.f32 %v336, %v534
        %v855 = vmul.f32 %v337, %v538
        %v856 = vmul.f32 %v338, %v542
        %v857 = vmul.f32 %v339, %v546
        %v858 = vmul.f32 %v340, %v550
        %v859 = vmul.f32 %v341, %v554
        %v860 = vmul.f32 %v342, %v558
        %v861 = vmul.f32 %v343, %v562
        %v862 = vmul.f32 %v344, %v566
        %v863 = vmul.f32 %v345, %v570
        %v864 = vmul.f32 %v346, %v574
        %v865 = vmul.f32 %v347, %v578
        %v866 = vmul.f32 %v348, %v582
        %v867 = vmul.f32 %v349, %v586
        %v868 = vmul.f32 %v350, %v590
        %v869 = vmul.f32 %v351, %v594
        %v870 = vmul.f32 %v352, %v598
        %v871 = vmul.f32 %v353, %v602
        %v872 = vmul.f32 %v354, %v606
        %v873 = vmul.f32 %v355, %v610
        %v874 = vmul.f32 %v356, %v614
        %v875 = vmul.f32 %v357, %v618
        %v876 = vmul.f32 %v358, %v622
        %v877 = vmul.f32 %v359, %v626
        %v878 = vmul.f32 %v360, %v630
        %v879 = vmul.f32 %v361, %v634
        %v880 = vmul.f32 %v362, %v638
        %v881 = vmul.f32 %v363, %v642
        %v882 = vmul.f32 %v364, %v646
        %v883 = vmul.f32 %v365, %v650
        %v884 = vmul.f32 %v366, %v654
        %v885 = vmul.f32 %v367, %v658
        %v886 = vmul.f32 %v368, %v662
        %v887 = vmul.f32 %v369, %v442
        %v888 = vmul.f32 %v370, %v446
        %v889 = vmul.f32 %v371, %v450
        %v890 = vmul.f32 %v372, %v454
        %v891 = vmul.f32 %v373, %v458
        %v892 = vmul.f32 %v374, %v462
        %v893 = vmul.f32 %v375, %v466
        %v894 = vmul.f32 %v376, %v470
        %v895 = vmul.f32 %v377, %v474
        %v896 = vmul.f32 %v378, %v478
        %v897 = vmul.f32 %v379, %v482
        %v898 = vmul.f32 %v380, %v486
        %v899 = vmul.f32 %v381, %v490
        %v900 = vmul.f32 %v382, %v494
        %v901 = vmul.f32 %v383, %v498
        %v902 = vmul.f32 %v384, %v502
        %v903 = vmul.f32 %v385, %v506
        %v904 = vmul.f32 %v386, %v510
        %v905 = vmul.f32 %v387, %v514
        %v906 = vmul.f32 %v388, %v518
        %v907 = vmul.f32 %v389, %v522
        %v908 = vmul.f32 %v390, %v526
        %v909 = vmul.f32 %v391, %v530
        %v910 = vmul.f32 %v392, %v534
        %v911 = vmul.f32 %v393, %v538
        %v912 = vmul.f32 %v394, %v542
        %v913 = vmul.f32 %v395, %v546
        %v914 = vmul.f32 %v396, %v550
        %v915 = vmul.f32 %v397, %v554
        %v916 = vmul.f32 %v398, %v558
        %v917 = vmul.f32 %v399, %v562
        %v918 = vmul.f32 %v400, %v566
        %v919 = vmul.f32 %v401, %v570
        %v920 = vmul.f32 %v402, %v574
        %v921 = vmul.f32 %v403, %v578
        %v922 = vmul.f32 %v404, %v582
        %v923 = vmul.f32 %v405, %v586
        %v924 = vmul.f32 %v406, %v590
        %v925 = vmul.f32 %v407, %v594
        %v926 = vmul.f32 %v408, %v598
        %v927 = vmul.f32 %v409, %v602
        %v928 = vmul.f32 %v410, %v606
        %v929 = vmul.f32 %v411, %v610
        %v930 = vmul.f32 %v412, %v614
        %v931 = vmul.f32 %v413, %v618
        %v932 = vmul.f32 %v414, %v622
        %v933 = vmul.f32 %v415, %v626
        %v934 = vmul.f32 %v416, %v630
        %v935 = vmul.f32 %v417, %v634
        %v936 = vmul.f32 %v418, %v638
        %v937 = vmul.f32 %v419, %v642
        %v938 = vmul.f32 %v420, %v646
        %v939 = vmul.f32 %v421, %v650
        %v940 = vmul.f32 %v422, %v654
        %v941 = vmul.f32 %v423, %v658
        %v942 = vmul.f32 %v424, %v662
        %v943 = vadd.f32 %v719, %v720
        %v944 = vadd.f32 %v943, %v721
        %v945 = vadd.f32 %v944, %v722
        %v946 = vadd.f32 %v945, %v723
        %v947 = vadd.f32 %v946, %v724
        %v948 = vadd.f32 %v947, %v725
        %v949 = vadd.f32 %v948, %v726
        %v950 = vadd.f32 %v949, %v727
        %v951 = vadd.f32 %v950, %v728
        %v952 = vadd.f32 %v951, %v729
        %v953 = vadd.f32 %v952, %v730
        %v954 = vadd.f32 %v953, %v731
        %v955 = vadd.f32 %v954, %v732
        %v956 = vadd.f32 %v955, %v733
        %v957 = vadd.f32 %v956, %v734
        %v958 = vadd.f32 %v957, %v735
        %v959 = vadd.f32 %v958, %v736
        %v960 = vadd.f32 %v959, %v737
        %v961 = vadd.f32 %v960, %v738
        %v962 = vadd.f32 %v961, %v739
        %v963 = vadd.f32 %v962, %v740
        %v964 = vadd.f32 %v963, %v741
        %v965 = vadd.f32 %v964, %v742
        %v966 = vadd.f32 %v965, %v743
        %v967 = vadd.f32 %v966, %v744
        %v968 = vadd.f32 %v967, %v745
        %v969 = vadd.f32 %v968, %v746
        %v970 = vadd.f32 %v969, %v747
        %v971 = vadd.f32 %v970, %v748
        %v972 = vadd.f32 %v971, %v749
        %v973 = vadd.f32 %v972, %v750
        %v974 = vadd.f32 %v973, %v751
        %v975 = vadd.f32 %v974, %v752
        %v976 = vadd.f32 %v975, %v753
        %v977 = vadd.f32 %v976, %v754
        %v978 = vadd.f32 %v977, %v755
        %v979 = vadd.f32 %v978, %v756
        %v980 = vadd.f32 %v979, %v757
        %v981 = vadd.f32 %v980, %v758
        %v982 = vadd.f32 %v981, %v759
        %v983 = vadd.f32 %v982, %v760
        %v984 = vadd.f32 %v983, %v761
        %v985 = vadd.f32 %v984, %v762
        %v986 = vadd.f32 %v985, %v763
        %v987 = vadd.f32 %v986, %v764
        %v988 = vadd.f32 %v987, %v765
        %v989 = vadd.f32 %v988, %v766
        %v990 = vadd.f32 %v989, %v767
        %v991 = vadd.f32 %v990, %v768
        %v992 = vadd.f32 %v991, %v769
        %v993 = vadd.f32 %v992, %v770
        %v994 = vadd.f32 %v993, %v771
        %v995 = vadd.f32 %v994, %v772
        %v996 = vadd.f32 %v995, %v773
        %v997 = vadd.f32 %v996, %v774
        %998 = vadd.xlane.f32.xlu0 %v997
        %v999 = vpop.xlane.xlu0 %998
        %v1000 = vadd.f32 %v775, %v776
        %v1001 = vadd.f32 %v1000, %v777
        %v1002 = vadd.f32 %v1001, %v778
        %v1003 = vadd.f32 %v1002, %v779
        %v1004 = vadd.f32 %v1003, %v780
        %v1005 = vadd.f32 %v1004, %v781
        %v1006 = vadd.f32 %v1005, %v782
        %v1007 = vadd.f32 %v1006, %v783
        %v1008 = vadd.f32 %v1007, %v784
        %v1009 = vadd.f32 %v1008, %v785
        %v1010 = vadd.f32 %v1009, %v786
        %v1011 = vadd.f32 %v1010, %v787
        %v1012 = vadd.f32 %v1011, %v788
        %v1013 = vadd.f32 %v1012, %v789
        %v1014 = vadd.f32 %v1013, %v790
        %v1015 = vadd.f32 %v1014, %v791
        %v1016 = vadd.f32 %v1015, %v792
        %v1017 = vadd.f32 %v1016, %v793
        %v1018 = vadd.f32 %v1017, %v794
        %v1019 = vadd.f32 %v1018, %v795
        %v1020 = vadd.f32 %v1019, %v796
        %v1021 = vadd.f32 %v1020, %v797
        %v1022 = vadd.f32 %v1021, %v798
        %v1023 = vadd.f32 %v1022, %v799
        %v1024 = vadd.f32 %v1023, %v800
        %v1025 = vadd.f32 %v1024, %v801
        %v1026 = vadd.f32 %v1025, %v802
        %v1027 = vadd.f32 %v1026, %v803
        %v1028 = vadd.f32 %v1027, %v804
        %v1029 = vadd.f32 %v1028, %v805
        %v1030 = vadd.f32 %v1029, %v806
        %v1031 = vadd.f32 %v1030, %v807
        %v1032 = vadd.f32 %v1031, %v808
        %v1033 = vadd.f32 %v1032, %v809
        %v1034 = vadd.f32 %v1033, %v810
        %v1035 = vadd.f32 %v1034, %v811
        %v1036 = vadd.f32 %v1035, %v812
        %v1037 = vadd.f32 %v1036, %v813
        %v1038 = vadd.f32 %v1037, %v814
        %v1039 = vadd.f32 %v1038, %v815
        %v1040 = vadd.f32 %v1039, %v816
        %v1041 = vadd.f32 %v1040, %v817
        %v1042 = vadd.f32 %v1041, %v818
        %v1043 = vadd.f32 %v1042, %v819
        %v1044 = vadd.f32 %v1043, %v820
        %v1045 = vadd.f32 %v1044, %v821
        %v1046 = vadd.f32 %v1045, %v822
        %v1047 = vadd.f32 %v1046, %v823
        %v1048 = vadd.f32 %v1047, %v824
        %v1049 = vadd.f32 %v1048, %v825
        %v1050 = vadd.f32 %v1049, %v826
        %v1051 = vadd.f32 %v1050, %v827
        %v1052 = vadd.f32 %v1051, %v828
        %v1053 = vadd.f32 %v1052, %v829
        %v1054 = vadd.f32 %v1053, %v830
        %1055 = vadd.xlane.f32.xlu0 %v1054
        %v1056 = vpop.xlane.xlu0 %1055
        %v1057 = vadd.f32 %v831, %v832
        %v1058 = vadd.f32 %v1057, %v833
        %v1059 = vadd.f32 %v1058, %v834
        %v1060 = vadd.f32 %v1059, %v835
        %v1061 = vadd.f32 %v1060, %v836
        %v1062 = vadd.f32 %v1061, %v837
        %v1063 = vadd.f32 %v1062, %v838
        %v1064 = vadd.f32 %v1063, %v839
        %v1065 = vadd.f32 %v1064, %v840
        %v1066 = vadd.f32 %v1065, %v841
        %v1067 = vadd.f32 %v1066, %v842
        %v1068 = vadd.f32 %v1067, %v843
        %v1069 = vadd.f32 %v1068, %v844
        %v1070 = vadd.f32 %v1069, %v845
        %v1071 = vadd.f32 %v1070, %v846
        %v1072 = vadd.f32 %v1071, %v847
        %v1073 = vadd.f32 %v1072, %v848
        %v1074 = vadd.f32 %v1073, %v849
        %v1075 = vadd.f32 %v1074, %v850
        %v1076 = vadd.f32 %v1075, %v851
        %v1077 = vadd.f32 %v1076, %v852
        %v1078 = vadd.f32 %v1077, %v853
        %v1079 = vadd.f32 %v1078, %v854
        %v1080 = vadd.f32 %v1079, %v855
        %v1081 = vadd.f32 %v1080, %v856
        %v1082 = vadd.f32 %v1081, %v857
        %v1083 = vadd.f32 %v1082, %v858
        %v1084 = vadd.f32 %v1083, %v859
        %v1085 = vadd.f32 %v1084, %v860
        %v1086 = vadd.f32 %v1085, %v861
        %v1087 = vadd.f32 %v1086, %v862
        %v1088 = vadd.f32 %v1087, %v863
        %v1089 = vadd.f32 %v1088, %v864
        %v1090 = vadd.f32 %v1089, %v865
        %v1091 = vadd.f32 %v1090, %v866
        %v1092 = vadd.f32 %v1091, %v867
        %v1093 = vadd.f32 %v1092, %v868
        %v1094 = vadd.f32 %v1093, %v869
        %v1095 = vadd.f32 %v1094, %v870
        %v1096 = vadd.f32 %v1095, %v871
        %v1097 = vadd.f32 %v1096, %v872
        %v1098 = vadd.f32 %v1097, %v873
        %v1099 = vadd.f32 %v1098, %v874
        %v1100 = vadd.f32 %v1099, %v875
        %v1101 = vadd.f32 %v1100, %v876
        %v1102 = vadd.f32 %v1101, %v877
        %v1103 = vadd.f32 %v1102, %v878
        %v1104 = vadd.f32 %v1103, %v879
        %v1105 = vadd.f32 %v1104, %v880
        %v1106 = vadd.f32 %v1105, %v881
        %v1107 = vadd.f32 %v1106, %v882
        %v1108 = vadd.f32 %v1107, %v883
        %v1109 = vadd.f32 %v1108, %v884
        %v1110 = vadd.f32 %v1109, %v885
        %v1111 = vadd.f32 %v1110, %v886
        %1112 = vadd.xlane.f32.xlu0 %v1111
        %v1113 = vpop.xlane.xlu0 %1112
        %v1114 = vadd.f32 %v887, %v888
        %v1115 = vadd.f32 %v1114, %v889
        %v1116 = vadd.f32 %v1115, %v890
        %v1117 = vadd.f32 %v1116, %v891
        %v1118 = vadd.f32 %v1117, %v892
        %v1119 = vadd.f32 %v1118, %v893
        %v1120 = vadd.f32 %v1119, %v894
        %v1121 = vadd.f32 %v1120, %v895
        %v1122 = vadd.f32 %v1121, %v896
        %v1123 = vadd.f32 %v1122, %v897
        %v1124 = vadd.f32 %v1123, %v898
        %v1125 = vadd.f32 %v1124, %v899
        %v1126 = vadd.f32 %v1125, %v900
        %v1127 = vadd.f32 %v1126, %v901
        %v1128 = vadd.f32 %v1127, %v902
        %v1129 = vadd.f32 %v1128, %v903
        %v1130 = vadd.f32 %v1129, %v904
        %v1131 = vadd.f32 %v1130, %v905
        %v1132 = vadd.f32 %v1131, %v906
        %v1133 = vadd.f32 %v1132, %v907
        %v1134 = vadd.f32 %v1133, %v908
        %v1135 = vadd.f32 %v1134, %v909
        %v1136 = vadd.f32 %v1135, %v910
        %v1137 = vadd.f32 %v1136, %v911
        %v1138 = vadd.f32 %v1137, %v912
        %v1139 = vadd.f32 %v1138, %v913
        %v1140 = vadd.f32 %v1139, %v914
        %v1141 = vadd.f32 %v1140, %v915
        %v1142 = vadd.f32 %v1141, %v916
        %v1143 = vadd.f32 %v1142, %v917
        %v1144 = vadd.f32 %v1143, %v918
        %v1145 = vadd.f32 %v1144, %v919
        %v1146 = vadd.f32 %v1145, %v920
        %v1147 = vadd.f32 %v1146, %v921
        %v1148 = vadd.f32 %v1147, %v922
        %v1149 = vadd.f32 %v1148, %v923
        %v1150 = vadd.f32 %v1149, %v924
        %v1151 = vadd.f32 %v1150, %v925
        %v1152 = vadd.f32 %v1151, %v926
        %v1153 = vadd.f32 %v1152, %v927
        %v1154 = vadd.f32 %v1153, %v928
        %v1155 = vadd.f32 %v1154, %v929
        %v1156 = vadd.f32 %v1155, %v930
        %v1157 = vadd.f32 %v1156, %v931
        %v1158 = vadd.f32 %v1157, %v932
        %v1159 = vadd.f32 %v1158, %v933
        %v1160 = vadd.f32 %v1159, %v934
        %v1161 = vadd.f32 %v1160, %v935
        %v1162 = vadd.f32 %v1161, %v936
        %v1163 = vadd.f32 %v1162, %v937
        %v1164 = vadd.f32 %v1163, %v938
        %v1165 = vadd.f32 %v1164, %v939
        %v1166 = vadd.f32 %v1165, %v940
        %v1167 = vadd.f32 %v1166, %v941
        %v1168 = vadd.f32 %v1167, %v942
        %1169 = vadd.xlane.f32.xlu0 %v1168
        %v1170 = vpop.xlane.xlu0 %1169
        %v1171 = vtanh.pop %v999
        %v1172 = vtanh.pop %v1056
        %v1173 = vtanh.pop %v1113
        %v1174 = vtanh.pop %v1170
        %v1175 = vld [vmem:[%s2] sm:$0xff]
        %v1176 = vld [vmem:[%s2 + $0x8] sm:$0xff]
        %v1177 = vld [vmem:[%s2 + $0x10] sm:$0xff]
        %v1178 = vld [vmem:[%s2 + $0x18] sm:$0xff]
        %v1179 = vmul.f32 %v1175, %v1171
        %v1180 = vmul.f32 %v1176, %v1172
        %v1181 = vmul.f32 %v1177, %v1173
        %v1182 = vmul.f32 %v1178, %v1174
        %vm1183 = vcmask 7168
        %v1184 = vsel %vm1183, %v1179, 0.0
        %v1185 = vsel %vm1183, %v1180, 0.0
        %v1186 = vadd.f32 %v1184, %v1185
        %v1187 = vsel %vm1183, %v1181, 0.0
        %v1188 = vadd.f32 %v1186, %v1187
        %v1189 = vsel %vm1183, %v1182, 0.0
        %v1190 = vadd.f32 %v1188, %v1189
        %v1191 = vrot.slane %v1190, 4
        %v1192 = vadd.f32 %v1190, %v1191
        %v1193 = vrot.slane %v1192, 2
        %v1194 = vadd.f32 %v1192, %v1193
        %v1195 = vrot.slane %v1194, 1
        %v1196 = vadd.f32 %v1194, %v1195
        %1198 = vset.pattern.permute.xlu0 0
        %1199 = vperm.xlu0 %1198, %v1196
        %v1200 = vpop.permute.xlu0 %1199
        %1202 = vst [vmem:[%s200] sm:$0x1] %v1200
        %s1203 = sand.u32 %s97, 1
        %s1204 = scalar_lea.sflag [#allocation4], %s1203
        %s1205 = sand.u32 %s97, 1
        %s1206 = scalar_lea.vmem [#allocation7], %s1205
        // Predicated region
        $region41: #{tpu_custom_call.1} parent=31 // pred_check
          %p1207 = pneg %p107
        $region42: #{tpu_custom_call.1} parent=31 // pred_check_branch
          %1209 = sbr.rel (%p1207) target = $region44
        $region43: #{tpu_custom_call.1} parent=31 // pred_region
          %s1211 = ssub.s32 16, 16
          %1212 = vsyncadd %s1204, %s1211
          %s1213 = smul.addr %s21, 16
          %s1214 = scalar_lea.hbm %s3, %s1213
          %s1216 = sshll.u32 %s1206, 4
          %s1217 = int_to_ptr.vmem [resolvable:$true] %s1216
          %1219 = dma.vmem_to_hbm [thread:$0]  %s1217, 16, %s1214, %s1204
        $region44: #{tpu_custom_call.1} parent=31 // pred_fallthru
          _
      $region32: #{tpu_custom_call.1} parent=5 // pred_fallthru
        _
      %p1220 = scmp.le.s32.totalorder 2, %s16
      // Predicated region
      $region45: #{tpu_custom_call.1} parent=5 // pred_check
        %p1221 = pneg %p1220
      $region46: #{tpu_custom_call.1} parent=5 // pred_check_branch
        %1223 = sbr.rel (%p1221) target = $region48
      $region47: #{tpu_custom_call.1} parent=5 // pred_region
        %s1224 = ssub.s32 %s16, 2
        // Predicated region
        $region49: #{tpu_custom_call.1} parent=47 // pred_check
          %p1225 = pneg %p113
        $region50: #{tpu_custom_call.1} parent=47 // pred_check_branch
          %1227 = sbr.rel (%p1225) target = $region52
        $region51: #{tpu_custom_call.1} parent=47 // pred_region
          %s1228 = sand.u32 %s98, 1
          %s1229 = scalar_lea.sflag [#allocation4], %s1228
          %s1230 = sand.u32 %s98, 1
          %s1231 = scalar_lea.vmem [#allocation7], %s1230
          %1232 = dma.done %s1229, 16
        $region52: #{tpu_custom_call.1} parent=47 // pred_fallthru
          _
      $region48: #{tpu_custom_call.1} parent=5 // pred_fallthru
        _
    $region6: #{tpu_custom_call.1} parent=1 // loop_footer
      %s20 = sadd.s32 1, %s16
    $region7: #{tpu_custom_call.1} parent=1 // loop_footer_branch
      %15 = sbr.rel target = $region3
    $region8: #{tpu_custom_call.1} parent=1 // loop_exit
      _
    %1233 = vsyncpa [#allocation3], 1
    %s1234 = scalar_lea.sflag [#allocation3], 1
    %1235 = vsyncpa %s1234, 1
    %1236 = vsyncpa [#allocation6], 1
    %s1237 = scalar_lea.sflag [#allocation6], 1
    %1238 = vsyncpa %s1237, 1
    %1239 = vsyncpa [#allocation4], 1
    %s1240 = scalar_lea.sflag [#allocation4], 1
    %1241 = vsyncpa %s1240, 1

</llo_original>
